<compile_context>
chip_gen: v7x
topology: tpu7x:2x2x1
jax: 0.10.0
libtpu: 0.0.40
codegen_flags: <defaults>
</compile_context>

<pallas_src>
import jax
import jax.numpy as jnp
import numpy as np
from jax.experimental import pallas as pl
from jax.experimental.pallas import tpu as pltpu

D_X, D_H, D_E = 1, 16, 10           # N_x, N_h, N_e defaults of the module
D_XE = D_X + D_E                    # size of xi and of the stacked [A; H] output
LANES = 128
TB = 128                            # batch tile (rows) for the batched variant


def _pad8(n):
    return ((n + 7) // 8) * 8


HP = _pad8(D_H)                     # 16
MISC_ROWS = _pad8(2 + D_X)          # b1 row, c row, D_X Kx rows (8 for defaults)

# Static row offsets of each parameter block inside the packed slab.
W1_OFF = 0                          # pad8(D_X) rows: row i = g0_w[:, i] in lanes [0:D_H]
W2_OFF = W1_OFF + _pad8(D_X)        # HP rows: row h = g2_w[h, :] in lanes [0:D_H]
B2_OFF = W2_OFF + HP                # HP rows: row h = g2_b[h] replicated across lanes
MT_OFF = B2_OFF + HP                # HP rows: row h = M[:, h] in lanes [0:D_XE], M = K[:,D_X:] @ g4_w
MISC_OFF = MT_OFF + HP              # row 0 = g0_b, row 1 = c = K[:,D_X:] @ g4_b,
                                    # rows 2+i = K[:, i]   (all lane layout)
SLAB_ROWS = MISC_OFF + MISC_ROWS    # 64 rows for the default sizes (32 KB)


# --------------------------------------------------------------------------- #
# Single-sample kernel (no MXU: everything fits in a handful of vregs)
# --------------------------------------------------------------------------- #
def _forward_kernel(x_ref, p_ref, out_ref):
    # ---- g layer 1: h1 in row layout (1,128), lanes = hidden unit ----------
    h1 = p_ref[MISC_OFF:MISC_OFF + 1, :]                      # g0_b row
    for i in range(D_X):                                      # D_X tiny & static
        h1 = h1 + x_ref[i] * p_ref[W1_OFF + i:W1_OFF + i + 1, :]
    h1 = jnp.maximum(h1, 0.0)                                 # lanes >= D_H are 0

    # ---- g layer 2: lane-reduce -> h2 column-replicated (HP,128) -----------
    h2 = jnp.sum(h1 * p_ref[W2_OFF:W2_OFF + HP, :], axis=1, keepdims=True)
    h2 = jnp.maximum(h2 + p_ref[B2_OFF:B2_OFF + HP, :], 0.0)  # rows >= D_H are 0

    # ---- fused (g layer 3 + K): sublane-reduce -> lane-dense row (1,128) ---
    out = jnp.sum(h2 * p_ref[MT_OFF:MT_OFF + HP, :], axis=0, keepdims=True)
    out = out + p_ref[MISC_OFF + 1:MISC_OFF + 2, :]           # + c
    for i in range(D_X):
        out = out + x_ref[i] * p_ref[MISC_OFF + 2 + i:MISC_OFF + 3 + i, :]

    # 8-row lane-dense store (unmasked vst, full-tile writeback DMA)
    out_ref[...] = jnp.broadcast_to(out, (8, LANES))


# --------------------------------------------------------------------------- #
# Batched kernel: grid over batch tiles, MXU matmuls on 128-padded weights
# --------------------------------------------------------------------------- #
def _batched_kernel(x_ref, w1_ref, b1_ref, w2_ref, b2_ref, m_ref, c_ref, kx_ref,
                    o_ref):
    xb = x_ref[...]                                           # (TB,128), x in lanes [0:D_X]
    hp = jax.lax.Precision.HIGHEST
    h1 = jnp.maximum(
        jnp.dot(xb, w1_ref[...], precision=hp, preferred_element_type=jnp.float32)
        + b1_ref[...], 0.0)
    h2 = jnp.maximum(
        jnp.dot(h1, w2_ref[...], precision=hp, preferred_element_type=jnp.float32)
        + b2_ref[...], 0.0)
    out = (jnp.dot(h2, m_ref[...], precision=hp, preferred_element_type=jnp.float32)
           + c_ref[...]
           + jnp.dot(xb, kx_ref[...], precision=hp, preferred_element_type=jnp.float32))
    o_ref[...] = out                                          # lane-dense (TB,128)


# --------------------------------------------------------------------------- #
# Parameter construction / one-time packing (hoisted out of the hot path)
# --------------------------------------------------------------------------- #
def init_params(key):
    """Deterministic synthetic parameters matching the PyTorch module shapes
    (Linear weights stored as (out, in), PyTorch convention)."""
    ks = jax.random.split(key, 8)
    scale = 0.1
    return {
        "g0_w": scale * jax.random.normal(ks[0], (D_H, D_X), jnp.float32),
        "g0_b": scale * jax.random.normal(ks[1], (D_H,), jnp.float32),
        "g2_w": scale * jax.random.normal(ks[2], (D_H, D_H), jnp.float32),
        "g2_b": scale * jax.random.normal(ks[3], (D_H,), jnp.float32),
        "g4_w": scale * jax.random.normal(ks[4], (D_E, D_H), jnp.float32),
        "g4_b": scale * jax.random.normal(ks[5], (D_E,), jnp.float32),
        "A_w": scale * jax.random.normal(ks[6], (D_X, D_XE), jnp.float32),
        "H_w": scale * jax.random.normal(ks[7], (D_E, D_XE), jnp.float32),
    }


def _as_np(params):
    return {k: np.asarray(v, np.float32) for k, v in params.items()}


def prepare_params(params):
    """One-time packing into the single-sample kernel's (64,128) f32 slab.
    NOTE: host NumPy -> only valid on concrete params, never call under jit."""
    p = _as_np(params)
    k = np.concatenate([p["A_w"], p["H_w"]], axis=0)          # (D_XE, D_XE)
    m = k[:, D_X:] @ p["g4_w"]                                # (D_XE, D_H): fused layer-3
    c = k[:, D_X:] @ p["g4_b"]                                # (D_XE,)

    slab = np.zeros((SLAB_ROWS, LANES), np.float32)
    for i in range(D_X):
        slab[W1_OFF + i, :D_H] = p["g0_w"][:, i]
    slab[W2_OFF:W2_OFF + D_H, :D_H] = p["g2_w"]
    slab[B2_OFF:B2_OFF + D_H, :] = p["g2_b"][:, None]
    slab[MT_OFF:MT_OFF + D_H, :D_XE] = m.T
    slab[MISC_OFF, :D_H] = p["g0_b"]
    slab[MISC_OFF + 1, :D_XE] = c
    for i in range(D_X):
        slab[MISC_OFF + 2 + i, :D_XE] = k[:, i]
    return jnp.asarray(slab)


def prepare_batched_params(params):
    """One-time 128-padding of the weights for the MXU batched kernel."""
    p = _as_np(params)
    k = np.concatenate([p["A_w"], p["H_w"]], axis=0)          # (D_XE, D_XE)

    w1 = np.zeros((LANES, LANES), np.float32); w1[:D_X, :D_H] = p["g0_w"].T
    b1 = np.zeros((1, LANES), np.float32);     b1[0, :D_H] = p["g0_b"]
    w2 = np.zeros((LANES, LANES), np.float32); w2[:D_H, :D_H] = p["g2_w"].T
    b2 = np.zeros((1, LANES), np.float32);     b2[0, :D_H] = p["g2_b"]
    m = np.zeros((LANES, LANES), np.float32);  m[:D_H, :D_XE] = (k[:, D_X:] @ p["g4_w"]).T
    c = np.zeros((1, LANES), np.float32);      c[0, :D_XE] = k[:, D_X:] @ p["g4_b"]
    kx = np.zeros((LANES, LANES), np.float32); kx[:D_X, :D_XE] = k[:, :D_X].T
    return tuple(jnp.asarray(a) for a in (w1, b1, w2, b2, m, c, kx))


# --------------------------------------------------------------------------- #
# Wrappers
# --------------------------------------------------------------------------- #
@jax.jit
def neural_network_forward(x, slab):
    """x: (D_X,) f32, slab: packed params -> (x_tp1: (D_X,), eta_tp1: (D_E,))"""
    x = x.reshape(D_X).astype(jnp.float32)
    flops = 2 * (D_X * D_H + D_H * D_H + D_H * D_XE + D_X * D_XE)
    out = pl.pallas_call(
        _forward_kernel,
        out_shape=jax.ShapeDtypeStruct((8, LANES), jnp.float32),
        in_specs=[
            pl.BlockSpec(memory_space=pltpu.MemorySpace.SMEM),   # x scalars
            pl.BlockSpec(memory_space=pltpu.MemorySpace.VMEM),   # packed slab
        ],
        out_specs=pl.BlockSpec(memory_space=pltpu.MemorySpace.VMEM),
        cost_estimate=pl.CostEstimate(
            flops=flops, transcendentals=0,
            bytes_accessed=4 * (SLAB_ROWS * LANES + D_X + 8 * LANES)),
    )(x, slab)
    return out[0, :D_X], out[0, D_X:D_XE]


@jax.jit
def neural_network_forward_batched(xb, bparams):
    """xb: (B, D_X) f32 -> (x_tp1: (B, D_X), eta_tp1: (B, D_E)).
    Semantically vmap of the module's forward over the batch."""
    w1, b1, w2, b2, m, c, kx = bparams
    B = xb.shape[0]
    bp = ((B + TB - 1) // TB) * TB
    x_lanes = jnp.zeros((bp, LANES), jnp.float32)
    x_lanes = x_lanes.at[:B, :D_X].set(xb.astype(jnp.float32).reshape(B, D_X))

    flops = 2 * bp * (D_X * D_H + D_H * D_H + D_H * D_XE + D_X * D_XE)
    byts = 4 * (2 * bp * LANES + 4 * LANES * LANES + 3 * LANES)
    const_spec = lambda shape: pl.BlockSpec(shape, lambda b: (0, 0))  # resident weights

    out = pl.pallas_call(
        _batched_kernel,
        out_shape=jax.ShapeDtypeStruct((bp, LANES), jnp.float32),
        grid_spec=pltpu.PrefetchScalarGridSpec(
            num_scalar_prefetch=0,
            grid=(bp // TB,),
            in_specs=[
                pl.BlockSpec((TB, LANES), lambda b: (b, 0)),   # x tile
                const_spec((LANES, LANES)),                    # W1 (in lanes -> h lanes)
                const_spec((1, LANES)),                        # b1
                const_spec((LANES, LANES)),                    # W2
                const_spec((1, LANES)),                        # b2
                const_spec((LANES, LANES)),                    # M  (fused g4 + K_eta)
                const_spec((1, LANES)),                        # c  (K_eta @ g4_b)
                const_spec((LANES, LANES)),                    # Kx
            ],
            out_specs=pl.BlockSpec((TB, LANES), lambda b: (b, 0)),
        ),
        compiler_params=pltpu.CompilerParams(
            dimension_semantics=("parallel",)),                # v7x: use both TCs
        cost_estimate=pl.CostEstimate(flops=flops, transcendentals=0,
                                      bytes_accessed=byts),
    )(x_lanes, w1, b1, w2, b2, m, c, kx)
    return out[:B, :D_X], out[:B, D_X:D_XE]


def _reference_forward(x, params):
    """Plain-JAX reference mirroring the PyTorch forward exactly."""
    h1 = jnp.maximum(x @ params["g0_w"].T + params["g0_b"], 0.0)
    h2 = jnp.maximum(h1 @ params["g2_w"].T + params["g2_b"], 0.0)
    eta = h2 @ params["g4_w"].T + params["g4_b"]
    xi = jnp.concatenate([x, eta])
    return xi @ params["A_w"].T, xi @ params["H_w"].T


if __name__ == "__main__":
    key = jax.random.PRNGKey(0)
    pkey, xkey, bkey = jax.random.split(key, 3)
    params = init_params(pkey)
    slab = prepare_params(params)                 # one-time packing (hoisted)
    bparams = prepare_batched_params(params)      # one-time packing (hoisted)

    # --- single-sample forward (the module's exact signature) ---------------
    x = jax.random.normal(xkey, (D_X,), jnp.float32)
    x_tp1, eta_tp1 = neural_network_forward(x, slab)
    jax.block_until_ready((x_tp1, eta_tp1))

    ref_x, ref_eta = _reference_forward(x, params)
    assert x_tp1.shape == (D_X,) and eta_tp1.shape == (D_E,)
    assert jnp.allclose(x_tp1, ref_x, atol=1e-5, rtol=1e-5)
    assert jnp.allclose(eta_tp1, ref_eta, atol=1e-5, rtol=1e-5)

    # --- batched forward (many independent samples, MXU path) ---------------
    B = 256
    xb = jax.random.normal(bkey, (B, D_X), jnp.float32)
    xb_tp1, etab_tp1 = neural_network_forward_batched(xb, bparams)
    jax.block_until_ready((xb_tp1, etab_tp1))

    refb_x, refb_eta = jax.vmap(lambda v: _reference_forward(v, params))(xb)
    assert xb_tp1.shape == (B, D_X) and etab_tp1.shape == (B, D_E)
    assert jnp.allclose(xb_tp1, refb_x, atol=1e-5, rtol=1e-5)
    assert jnp.allclose(etab_tp1, refb_eta, atol=1e-5, rtol=1e-5)

    print("KERNEL_OK")
</pallas_src>

<mosaic_0001>
module attributes {stable_mosaic.version = 11 : i64} {
  func.func @_forward_kernel(%arg0: memref<1xf32, #tpu.memory_space<smem>>, %arg1: memref<64x128xf32, #tpu.memory_space<vmem>>, %arg2: memref<8x128xf32, #tpu.memory_space<vmem>>) attributes {dimension_semantics = [], scalar_prefetch = 0 : i64, scratch_operands = 0 : i64, tpu.core_type = #tpu.core_type<tc>} {
    %c56 = arith.constant 56 : index
    %c0 = arith.constant 0 : index
    %0 = vector.load %arg1[%c56, %c0] : memref<64x128xf32, #tpu.memory_space<vmem>>, vector<1x128xf32>
    %c0_0 = arith.constant 0 : index
    %1 = memref.load %arg0[%c0_0] : memref<1xf32, #tpu.memory_space<smem>>
    %c0_1 = arith.constant 0 : index
    %c0_2 = arith.constant 0 : index
    %2 = vector.load %arg1[%c0_1, %c0_2] : memref<64x128xf32, #tpu.memory_space<vmem>>, vector<1x128xf32>
    %3 = vector.broadcast %1 : f32 to vector<1x128xf32>
    %4 = arith.mulf %3, %2 : vector<1x128xf32>
    %5 = arith.addf %0, %4 : vector<1x128xf32>
    %cst = arith.constant 0.000000e+00 : f32
    %6 = vector.broadcast %cst : f32 to vector<1x128xf32>
    %7 = arith.maximumf %5, %6 : vector<1x128xf32>
    %c8 = arith.constant 8 : index
    %c0_3 = arith.constant 0 : index
    %8 = vector.load %arg1[%c8, %c0_3] : memref<64x128xf32, #tpu.memory_space<vmem>>, vector<16x128xf32>
    %9 = vector.broadcast %7 : vector<1x128xf32> to vector<16x128xf32>
    %10 = arith.mulf %9, %8 : vector<16x128xf32>
    %cst_4 = arith.constant dense<0.000000e+00> : vector<16xf32>
    %11 = vector.multi_reduction <add>, %10, %cst_4 [1] : vector<16x128xf32> to vector<16xf32>
    %12 = vector.shape_cast %11 : vector<16xf32> to vector<16x1xf32>
    %c24 = arith.constant 24 : index
    %c0_5 = arith.constant 0 : index
    %13 = vector.load %arg1[%c24, %c0_5] : memref<64x128xf32, #tpu.memory_space<vmem>>, vector<16x128xf32>
    %14 = vector.broadcast %12 : vector<16x1xf32> to vector<16x128xf32>
    %15 = arith.addf %14, %13 : vector<16x128xf32>
    %cst_6 = arith.constant 0.000000e+00 : f32
    %16 = vector.broadcast %cst_6 : f32 to vector<16x128xf32>
    %17 = arith.maximumf %15, %16 : vector<16x128xf32>
    %c40 = arith.constant 40 : index
    %c0_7 = arith.constant 0 : index
    %18 = vector.load %arg1[%c40, %c0_7] : memref<64x128xf32, #tpu.memory_space<vmem>>, vector<16x128xf32>
    %19 = arith.mulf %17, %18 : vector<16x128xf32>
    %cst_8 = arith.constant dense<0.000000e+00> : vector<128xf32>
    %20 = vector.multi_reduction <add>, %19, %cst_8 [0] : vector<16x128xf32> to vector<128xf32>
    %21 = vector.shape_cast %20 : vector<128xf32> to vector<1x128xf32>
    %c57 = arith.constant 57 : index
    %c0_9 = arith.constant 0 : index
    %22 = vector.load %arg1[%c57, %c0_9] : memref<64x128xf32, #tpu.memory_space<vmem>>, vector<1x128xf32>
    %23 = arith.addf %21, %22 : vector<1x128xf32>
    %c0_10 = arith.constant 0 : index
    %24 = memref.load %arg0[%c0_10] : memref<1xf32, #tpu.memory_space<smem>>
    %c58 = arith.constant 58 : index
    %c0_11 = arith.constant 0 : index
    %25 = vector.load %arg1[%c58, %c0_11] : memref<64x128xf32, #tpu.memory_space<vmem>>, vector<1x128xf32>
    %26 = vector.broadcast %24 : f32 to vector<1x128xf32>
    %27 = arith.mulf %26, %25 : vector<1x128xf32>
    %28 = arith.addf %23, %27 : vector<1x128xf32>
    %29 = vector.shape_cast %28 : vector<1x128xf32> to vector<1x128xf32>
    %30 = vector.broadcast %29 : vector<1x128xf32> to vector<8x128xf32>
    %c0_12 = arith.constant 0 : index
    %c0_13 = arith.constant 0 : index
    %31 = vector.load %arg2[%c0_12, %c0_13] : memref<8x128xf32, #tpu.memory_space<vmem>>, vector<8x128xf32>
    tpu.vector_store %arg2[%c0_12, %c0_13], %30 {strides = array<i32>} : memref<8x128xf32, #tpu.memory_space<vmem>>, vector<8x128xf32>,
    return
  }
}

</mosaic_0001>

<llo_original>
// kernel: neural_network_forward.1
$region0: #{neural_network_forward.1}
  #allocation0 [shape = 'u32[]', space=smem, size = 0x4, offset = 0x4, fixed_abs, tag = 'smem constant byte address 0x4 - core index']
  #allocation1 [shape = 'u32[144,128]{1,0:T(1,128)}', space=vmem, size = 0x12000, scoped, tag = 'internal scratch']
  #allocation2 [shape = 'f32[1]{0:T(128)S(6)}', space=smem, size = 0x200, scoped, tag = 'scoped memory for neural_network_forward.1']
  %s0 = inlined_call_operand.<no memory space> [shape: f32[1], index: 0, kind: input, shape index: {}]
  %s1 = inlined_call_operand.hbm [shape: f32[64,128], index: 1, kind: input, shape index: {}]
  %s2 = inlined_call_operand.vmem [shape: f32[8,128], index: 2, kind: output, shape index: {}]
  %s3 = sld [smem:[#allocation0]]
  $region22: #{neural_network_forward.1} parent=0
    _
  %s5 = ssub.s32 1, %s3
  %s6 = scalar_select 0, %s5, %s3
  %7 = sst [smem:[#allocation2]] %s0
  $region1: #{neural_network_forward.1} parent=0
    #allocation3 [shape = 'u8[32768]{0}', space=vmem, size = 0x8000, scoped, tag = 'input window, operand 1, single buffered']
    #allocation4 [shape = 's32[1]{0}', space=sflag, size = 0x4, scoped, tag = 'scoped memory for neural_network_forward.1']
    %8 = vsyncpa [#allocation4], 0
    // Predicated region
    $region2: #{neural_network_forward.1} parent=1 // pred_check
      _
    $region3: #{neural_network_forward.1} parent=1 // pred_check_branch
      %10 = sbr.rel (0) target = $region5
    $region4: #{neural_network_forward.1} parent=1 // pred_region
      _
    $region5: #{neural_network_forward.1} parent=1 // pred_fallthru
      _
    // Predicated region
    $region6: #{neural_network_forward.1} parent=1 // pred_check
      _
    $region7: #{neural_network_forward.1} parent=1 // pred_check_branch
      %12 = sbr.rel (0) target = $region9
    $region8: #{neural_network_forward.1} parent=1 // pred_region
      %s14 = ssub.s32 1024, 1024
      %15 = vsyncadd [#allocation4], %s14
      %s16 = sshll.u32 [#allocation3], 4
      %s17 = int_to_ptr.vmem [resolvable:$true] %s16
      %22 = dma.hbm_to_vmem [thread:$0]  %s1, 1024, %s17, [#allocation4], 128, 128, 8
    $region9: #{neural_network_forward.1} parent=1 // pred_fallthru
      _
    // Predicated region
    $region10: #{neural_network_forward.1} parent=1 // pred_check
      _
    $region11: #{neural_network_forward.1} parent=1 // pred_check_branch
      %24 = sbr.rel (0) target = $region13
    $region12: #{neural_network_forward.1} parent=1 // pred_region
      %25 = dma.done [#allocation4], 1024
    $region13: #{neural_network_forward.1} parent=1 // pred_fallthru
      _
    %v26 = vld [vmem:[#allocation3 + $0x38] sm:$0x1]
    %s27 = sld [smem:[#allocation2]]
    %v28 = vld [vmem:[#allocation3] sm:$0x1]
    %v29 = vstv %s27
    %v30 = vmul.f32 %v29, %v28
    %v31 = vadd.f32 %v26, %v30
    %v32 = vmax.f32 %v31, 0.0
    %v33 = vld [vmem:[#allocation3 + $0x8] sm:$0xff]
    %v34 = vld [vmem:[#allocation3 + $0x10] sm:$0xff]
    %v35 = vlaneseq
    %v36 = vshrl.u32 %v35, 7
    %v37 = vsub.s32 0, %v36
    %v38 = vrot.slane %v32, %v37
    %v39 = vmul.f32 %v38, %v33
    %v40 = vmul.f32 %v38, %v34
    %41 = vadd.xlane.f32.xlu0 %v39
    %v42 = vpop.xlane.xlu0 %41
    %43 = vadd.xlane.f32.xlu0 %v40
    %v44 = vpop.xlane.xlu0 %43
    %v45 = vld [vmem:[#allocation3 + $0x18] sm:$0xff]
    %v46 = vld [vmem:[#allocation3 + $0x20] sm:$0xff]
    %v47 = vadd.f32 %v42, %v45
    %v48 = vadd.f32 %v44, %v46
    %v49 = vmax.f32 %v47, 0.0
    %v50 = vmax.f32 %v48, 0.0
    %v51 = vld [vmem:[#allocation3 + $0x28] sm:$0xff]
    %v52 = vld [vmem:[#allocation3 + $0x30] sm:$0xff]
    %v53 = vmul.f32 %v49, %v51
    %v54 = vmul.f32 %v50, %v52
    %v55 = vadd.f32 %v53, %v54
    %v56 = vrot.slane %v55, 4
    %v57 = vadd.f32 %v55, %v56
    %v58 = vrot.slane %v57, 2
    %v59 = vadd.f32 %v57, %v58
    %v60 = vrot.slane %v59, 1
    %v61 = vadd.f32 %v59, %v60
    %v62 = vld [vmem:[#allocation3 + $0x39] sm:$0x1]
    %v63 = vadd.f32 %v61, %v62
    %v64 = vld [vmem:[#allocation3 + $0x3a] sm:$0x1]
    %v65 = vmul.f32 %v29, %v64
    %v66 = vadd.f32 %v63, %v65
    %v67 = vlaneseq
    %v68 = vshrl.u32 %v67, 7
    %v69 = vsub.s32 0, %v68
    %v70 = vrot.slane %v66, %v69
    %71 = vst [vmem:[%s2] sm:$0xff] %v70
    // Predicated region
    $region14: #{neural_network_forward.1} parent=1 // pred_check
      _
    $region15: #{neural_network_forward.1} parent=1 // pred_check_branch
      %73 = sbr.rel (0) target = $region17
    $region16: #{neural_network_forward.1} parent=1 // pred_region
      _
    $region17: #{neural_network_forward.1} parent=1 // pred_fallthru
      _
    // Predicated region
    $region18: #{neural_network_forward.1} parent=1 // pred_check
      _
    $region19: #{neural_network_forward.1} parent=1 // pred_check_branch
      %75 = sbr.rel (0) target = $region21
    $region20: #{neural_network_forward.1} parent=1 // pred_region
      _
    $region21: #{neural_network_forward.1} parent=1 // pred_fallthru
      _
    %76 = vsyncpa [#allocation4], 1

</llo_original>
